<compile_context>
chip_gen: v7x
topology: tpu7x:2x2x1
jax: 0.10.0
libtpu: 0.0.40
codegen_flags: <defaults>
</compile_context>

<pallas_src>
import jax
import jax.numpy as jnp
from jax.experimental import pallas as pl
from jax.experimental.pallas import tpu as pltpu

PAD = 128  # lane padding for every output-channel dim (C1, C2, latent)


def make_vae_kernel(T, latent_pad):
    """Kernel closure over the (static) sequence length and padded latent width."""

    def kernel(x_ref, eps_ref, w1_ref, b1_ref, w2_ref, b2_ref, wh_ref, bh_ref,
               out_ref):
        # x_ref:   (TB*T, C_in) f32        eps_ref: (TB, latent_pad) f32
        # w1_ref:  (3, C_in, PAD) bf16     w2_ref:  (3, PAD, PAD) bf16
        # wh_ref:  (PAD, 2*PAD) bf16       biases f32, lane-padded
        # out_ref: (TB, 3*latent_pad) f32  packed [mu_pad | logvar_pad | z_pad]
        x = x_ref[...]                       # keep elementwise path in f32 (v5e)
        M = x.shape[0]
        tb = M // T

        def conv_relu(h, w_ref, b_ref):
            # Conv1d(k=3, pad=1) + ReLU as three accumulated per-tap matmuls.
            # Shifted operands are built with a zero edge row + `row % T` mask
            # so taps do not leak across sequences within the batch tile.
            zrow = jnp.zeros((1, h.shape[1]), h.dtype)
            row = jax.lax.broadcasted_iota(jnp.int32, h.shape, 0)
            h_m1 = jnp.concatenate([zrow, h[:-1]], axis=0)       # h[t-1]
            h_m1 = jnp.where(row % T == 0, 0.0, h_m1)
            h_p1 = jnp.concatenate([h[1:], zrow], axis=0)        # h[t+1]
            h_p1 = jnp.where(row % T == T - 1, 0.0, h_p1)

            acc = jnp.dot(h_m1.astype(jnp.bfloat16), w_ref[0],
                          preferred_element_type=jnp.float32)
            acc = acc + jnp.dot(h.astype(jnp.bfloat16), w_ref[1],
                                preferred_element_type=jnp.float32)
            acc = acc + jnp.dot(h_p1.astype(jnp.bfloat16), w_ref[2],
                                preferred_element_type=jnp.float32)
            return jnp.maximum(acc + b_ref[...], 0.0)

        h = conv_relu(x, w1_ref, b1_ref)                          # (M, PAD)
        h = conv_relu(h, w2_ref, b2_ref)                          # (M, PAD)

        # x.mean(dim=-1) in the PyTorch NCT layout == mean over time, per
        # sequence.  Segmented reduce: regroup whole 8-row tiles (T % 8 == 0).
        pooled = jnp.mean(h.reshape(tb, T, h.shape[-1]), axis=1)  # (TB, PAD)

        # Fused mu/logvar head: one (PAD, 2*PAD) matmul; halves are 128-aligned.
        head = jnp.dot(pooled.astype(jnp.bfloat16), wh_ref[...],
                       preferred_element_type=jnp.float32) + bh_ref[...]
        mu = head[:, :latent_pad]
        logvar = head[:, latent_pad:]

        # reparameterize: z = mu + eps * exp(0.5 * logvar)  (f32 VPU/EUP path)
        z = mu + eps_ref[...] * jnp.exp(0.5 * logvar)

        # Two lane-aligned stores into the packed slab (no lane concatenate).
        out_ref[:, :2 * latent_pad] = head
        out_ref[:, 2 * latent_pad:] = z

    return kernel


def vae_forward(x, eps, params, *, block_b=None):
    """x: (B, T, C_in) f32, eps: (B, latent) f32 -> (mu, logvar, z), each (B, latent)."""
    B, T, C_in = x.shape
    latent = params['latent']
    LP = params['latent_pad']

    if block_b is None:
        block_b = B                 # tiny batch: single grid step, one VMEM block
    # For production tiling pick block_b so B % block_b == 0 and block_b is a
    # multiple of 8 (sublane alignment of the eps / out blocks).
    assert B % block_b == 0 and (block_b * T) % 8 == 0
    nb = B // block_b

    x2d = x.reshape(B * T, C_in)
    eps_pad = jnp.zeros((B, LP), jnp.float32).at[:, :latent].set(eps)

    packed = pl.pallas_call(
        make_vae_kernel(T, LP),
        out_shape=jax.ShapeDtypeStruct((B, 3 * LP), jnp.float32),
        grid=(nb,),
        in_specs=[
            pl.BlockSpec((block_b * T, C_in), lambda i: (i, 0)),   # x, per batch tile
            pl.BlockSpec((block_b, LP), lambda i: (i, 0)),         # eps, per batch tile
            pl.BlockSpec(params['w1'].shape, lambda i: (0, 0, 0)),  # weights stay
            pl.BlockSpec(params['b1'].shape, lambda i: (0, 0)),     # VMEM-resident
            pl.BlockSpec(params['w2'].shape, lambda i: (0, 0, 0)),
            pl.BlockSpec(params['b2'].shape, lambda i: (0, 0)),
            pl.BlockSpec(params['wh'].shape, lambda i: (0, 0)),
            pl.BlockSpec(params['bh'].shape, lambda i: (0, 0)),
        ],
        out_specs=pl.BlockSpec((block_b, 3 * LP), lambda i: (i, 0)),
        compiler_params=pltpu.CompilerParams(
            dimension_semantics=("parallel",)),
    )(x2d, eps_pad, params['w1'], params['b1'], params['w2'], params['b2'],
      params['wh'], params['bh'])

    mu = packed[:, :latent]
    logvar = packed[:, LP:LP + latent]
    z = packed[:, 2 * LP:2 * LP + latent]
    return mu, logvar, z


def init_raw_params(key, c_in, c1, c2, latent):
    """Deterministic synthetic parameters in 'PyTorch-like' layout.

    Conv weights are (3, Cin, Cout) (kernel tap first, taps ordered [t-1, t, t+1]);
    Linear weights are stored pre-transposed as (in, out) so y = h @ w + b.
    """
    ks = jax.random.split(key, 8)
    scale = 0.1
    return {
        'w1':  scale * jax.random.normal(ks[0], (3, c_in, c1), jnp.float32),
        'b1':  scale * jax.random.normal(ks[1], (1, c1), jnp.float32),
        'w2':  scale * jax.random.normal(ks[2], (3, c1, c2), jnp.float32),
        'b2':  scale * jax.random.normal(ks[3], (1, c2), jnp.float32),
        'wmu': scale * jax.random.normal(ks[4], (c2, latent), jnp.float32),
        'bmu': scale * jax.random.normal(ks[5], (1, latent), jnp.float32),
        'wlv': scale * jax.random.normal(ks[6], (c2, latent), jnp.float32),
        'blv': scale * jax.random.normal(ks[7], (1, latent), jnp.float32),
    }


def prepare_kernel_params(raw):
    """Host-side weight prep: per-tap conv weights, zero-padded output channels
    to 128 lanes, fused (and 128-aligned) mu/logvar head, bf16 MXU operands."""
    c_in, c1 = raw['w1'].shape[1], raw['w1'].shape[2]
    c2 = raw['w2'].shape[2]
    latent = raw['wmu'].shape[1]

    def pad_conv(w, cin_pad, cout_pad):
        k, cin, cout = w.shape
        out = jnp.zeros((k, cin_pad, cout_pad), jnp.float32)
        return out.at[:, :cin, :cout].set(w).astype(jnp.bfloat16)

    def pad_bias(b, n_pad):
        return jnp.zeros((1, n_pad), jnp.float32).at[:, :b.shape[1]].set(b)

    wh = jnp.zeros((PAD, 2 * PAD), jnp.float32)
    wh = wh.at[:c2, :latent].set(raw['wmu'])
    wh = wh.at[:c2, PAD:PAD + latent].set(raw['wlv'])
    bh = jnp.zeros((1, 2 * PAD), jnp.float32)
    bh = bh.at[:, :latent].set(raw['bmu'])
    bh = bh.at[:, PAD:PAD + latent].set(raw['blv'])

    return {
        'w1': pad_conv(raw['w1'], c_in, PAD), 'b1': pad_bias(raw['b1'], PAD),
        'w2': pad_conv(raw['w2'], PAD, PAD),  'b2': pad_bias(raw['b2'], PAD),
        'wh': wh.astype(jnp.bfloat16),        'bh': bh,
        'latent': latent, 'latent_pad': PAD,
    }


def vae_reference(x, eps, raw):
    """Pure-JAX f32 reference of the same forward pass (for tolerance check)."""
    def conv1d_k3_relu(h, w, b):        # h (B,T,C), w (3,Cin,Cout), b (1,Cout)
        hm1 = jnp.pad(h, ((0, 0), (1, 0), (0, 0)))[:, :-1]
        hp1 = jnp.pad(h, ((0, 0), (0, 1), (0, 0)))[:, 1:]
        out = (jnp.einsum('btc,cd->btd', hm1, w[0])
               + jnp.einsum('btc,cd->btd', h, w[1])
               + jnp.einsum('btc,cd->btd', hp1, w[2]) + b)
        return jax.nn.relu(out)

    h = conv1d_k3_relu(x, raw['w1'], raw['b1'])
    h = conv1d_k3_relu(h, raw['w2'], raw['b2'])
    pooled = h.mean(axis=1)                                   # (B, C2)
    mu = pooled @ raw['wmu'] + raw['bmu']
    logvar = pooled @ raw['wlv'] + raw['blv']
    z = mu + eps * jnp.exp(0.5 * logvar)
    return mu, logvar, z


if __name__ == "__main__":
    # VAE(input_shape=(ts_len=16, C_in=4), layer_sizes=[8, 16], latent_size=8)
    #   -> encoder layer_sizes = [4, 8, 16, 8]
    B, T, C_IN = 2, 16, 4
    C1, C2, LATENT = 8, 16, 8

    key = jax.random.PRNGKey(0)
    k_x, k_eps, k_p = jax.random.split(key, 3)

    x = jax.nn.sigmoid(jax.random.normal(k_x, (B, T, C_IN), jnp.float32))
    eps = jax.random.normal(k_eps, (B, LATENT), jnp.float32)
    raw = init_raw_params(k_p, C_IN, C1, C2, LATENT)
    params = prepare_kernel_params(raw)

    mu, logvar, z = vae_forward(x, eps, params)
    jax.block_until_ready((mu, logvar, z))

    assert mu.shape == (B, LATENT) and logvar.shape == (B, LATENT) and z.shape == (B, LATENT)
    assert bool(jnp.all(jnp.isfinite(mu))) and bool(jnp.all(jnp.isfinite(logvar))) \
        and bool(jnp.all(jnp.isfinite(z)))

    # Compare against a pure-JAX f32 reference (bf16 MXU operands -> small drift).
    mu_r, lv_r, z_r = vae_reference(x, eps, raw)
    assert bool(jnp.allclose(mu, mu_r, atol=5e-2, rtol=5e-2))
    assert bool(jnp.allclose(logvar, lv_r, atol=5e-2, rtol=5e-2))
    assert bool(jnp.allclose(z, z_r, atol=5e-2, rtol=5e-2))

    print("KERNEL_OK")
</pallas_src>

<mosaic_0001>
module attributes {stable_mosaic.version = 11 : i64} {
  func.func @kernel(%arg0: i32, %arg1: memref<32x4xf32, #tpu.memory_space<vmem>>, %arg2: memref<2x128xf32, #tpu.memory_space<vmem>>, %arg3: memref<3x4x128xbf16, #tpu.memory_space<vmem>>, %arg4: memref<1x128xf32, #tpu.memory_space<vmem>>, %arg5: memref<3x128x128xbf16, #tpu.memory_space<vmem>>, %arg6: memref<1x128xf32, #tpu.memory_space<vmem>>, %arg7: memref<128x256xbf16, #tpu.memory_space<vmem>>, %arg8: memref<1x256xf32, #tpu.memory_space<vmem>>, %arg9: memref<2x384xf32, #tpu.memory_space<vmem>>) attributes {dimension_semantics = [#tpu.dimension_semantics<parallel>], iteration_bounds = array<i64: 1>, scalar_prefetch = 0 : i64, scratch_operands = 0 : i64, tpu.core_type = #tpu.core_type<tc>, window_params = [{transform_indices = @transform_0, window_bounds = array<i64: 32, 4>}, {transform_indices = @transform_1, window_bounds = array<i64: 2, 128>}, {pipeline_mode = #tpu.pipeline_mode<synchronous>, transform_indices = @transform_2, window_bounds = array<i64: 3, 4, 128>}, {pipeline_mode = #tpu.pipeline_mode<synchronous>, transform_indices = @transform_3, window_bounds = array<i64: 1, 128>}, {pipeline_mode = #tpu.pipeline_mode<synchronous>, transform_indices = @transform_4, window_bounds = array<i64: 3, 128, 128>}, {pipeline_mode = #tpu.pipeline_mode<synchronous>, transform_indices = @transform_5, window_bounds = array<i64: 1, 128>}, {pipeline_mode = #tpu.pipeline_mode<synchronous>, transform_indices = @transform_6, window_bounds = array<i64: 128, 256>}, {pipeline_mode = #tpu.pipeline_mode<synchronous>, transform_indices = @transform_7, window_bounds = array<i64: 1, 256>}, {transform_indices = @transform_8, window_bounds = array<i64: 2, 384>}]} {
    %c0 = arith.constant 0 : index
    %c0_0 = arith.constant 0 : index
    %0 = vector.load %arg1[%c0, %c0_0] : memref<32x4xf32, #tpu.memory_space<vmem>>, vector<32x4xf32>
    %cst = arith.constant 0.000000e+00 : f32
    %1 = vector.broadcast %cst : f32 to vector<1x4xf32>
    %2 = tpu.iota {dimensions = array<i32: 0>} : vector<32x4xi32>
    %3 = vector.extract_strided_slice %0 {offsets = [0, 0], sizes = [31, 4], strides = [1, 1]} : vector<32x4xf32> to vector<31x4xf32>
    %4 = tpu.concatenate %1, %3 in 0 : vector<1x4xf32>, vector<31x4xf32> -> vector<32x4xf32>
    %c16_i32 = arith.constant 16 : i32
    %c0_i32 = arith.constant 0 : i32
    %5 = arith.cmpi eq, %c16_i32, %c0_i32 : i32
    %c1_i32 = arith.constant 1 : i32
    %6 = arith.select %5, %c1_i32, %c16_i32 : i32
    %7 = vector.broadcast %6 : i32 to vector<32x4xi32>
    %8 = arith.remsi %2, %7 : vector<32x4xi32>
    %c0_i32_1 = arith.constant 0 : i32
    %9 = vector.broadcast %c0_i32_1 : i32 to vector<32x4xi32>
    %10 = arith.cmpi ne, %8, %9 : vector<32x4xi32>
    %c0_i32_2 = arith.constant 0 : i32
    %11 = vector.broadcast %c0_i32_2 : i32 to vector<32x4xi32>
    %12 = arith.cmpi slt, %8, %11 : vector<32x4xi32>
    %c0_i32_3 = arith.constant 0 : i32
    %13 = arith.cmpi slt, %6, %c0_i32_3 : i32
    %14 = vector.broadcast %13 : i1 to vector<32x4xi1>
    %15 = vector.broadcast %14 : vector<32x4xi1> to vector<32x4xi1>
    %16 = arith.xori %12, %15 : vector<32x4xi1>
    %17 = arith.andi %16, %10 : vector<32x4xi1>
    %18 = vector.broadcast %6 : i32 to vector<32x4xi32>
    %19 = arith.addi %8, %18 : vector<32x4xi32>
    %20 = arith.select %17, %19, %8 : vector<32x4xi1>, vector<32x4xi32>
    %c0_i32_4 = arith.constant 0 : i32
    %21 = vector.broadcast %c0_i32_4 : i32 to vector<32x4xi32>
    %22 = arith.cmpi eq, %20, %21 : vector<32x4xi32>
    %cst_5 = arith.constant 0.000000e+00 : f32
    %23 = vector.broadcast %cst_5 : f32 to vector<32x4xf32>
    %24 = arith.select %22, %23, %4 : vector<32x4xi1>, vector<32x4xf32>
    %25 = vector.extract_strided_slice %0 {offsets = [1, 0], sizes = [31, 4], strides = [1, 1]} : vector<32x4xf32> to vector<31x4xf32>
    %26 = tpu.concatenate %25, %1 in 0 : vector<31x4xf32>, vector<1x4xf32> -> vector<32x4xf32>
    %c16_i32_6 = arith.constant 16 : i32
    %c0_i32_7 = arith.constant 0 : i32
    %27 = arith.cmpi eq, %c16_i32_6, %c0_i32_7 : i32
    %c1_i32_8 = arith.constant 1 : i32
    %28 = arith.select %27, %c1_i32_8, %c16_i32_6 : i32
    %29 = vector.broadcast %28 : i32 to vector<32x4xi32>
    %30 = arith.remsi %2, %29 : vector<32x4xi32>
    %c0_i32_9 = arith.constant 0 : i32
    %31 = vector.broadcast %c0_i32_9 : i32 to vector<32x4xi32>
    %32 = arith.cmpi ne, %30, %31 : vector<32x4xi32>
    %c0_i32_10 = arith.constant 0 : i32
    %33 = vector.broadcast %c0_i32_10 : i32 to vector<32x4xi32>
    %34 = arith.cmpi slt, %30, %33 : vector<32x4xi32>
    %c0_i32_11 = arith.constant 0 : i32
    %35 = arith.cmpi slt, %28, %c0_i32_11 : i32
    %36 = vector.broadcast %35 : i1 to vector<32x4xi1>
    %37 = vector.broadcast %36 : vector<32x4xi1> to vector<32x4xi1>
    %38 = arith.xori %34, %37 : vector<32x4xi1>
    %39 = arith.andi %38, %32 : vector<32x4xi1>
    %40 = vector.broadcast %28 : i32 to vector<32x4xi32>
    %41 = arith.addi %30, %40 : vector<32x4xi32>
    %42 = arith.select %39, %41, %30 : vector<32x4xi1>, vector<32x4xi32>
    %c15_i32 = arith.constant 15 : i32
    %43 = vector.broadcast %c15_i32 : i32 to vector<32x4xi32>
    %44 = arith.cmpi eq, %42, %43 : vector<32x4xi32>
    %cst_12 = arith.constant 0.000000e+00 : f32
    %45 = vector.broadcast %cst_12 : f32 to vector<32x4xf32>
    %46 = arith.select %44, %45, %26 : vector<32x4xi1>, vector<32x4xf32>
    %47 = arith.truncf %24 : vector<32x4xf32> to vector<32x4xbf16>
    %c0_13 = arith.constant 0 : index
    %c0_14 = arith.constant 0 : index
    %c0_15 = arith.constant 0 : index
    %48 = vector.load %arg3[%c0_13, %c0_14, %c0_15] : memref<3x4x128xbf16, #tpu.memory_space<vmem>>, vector<1x4x128xbf16>
    %49 = vector.shape_cast %48 : vector<1x4x128xbf16> to vector<4x128xbf16>
    %cst_16 = arith.constant dense<0.000000e+00> : vector<32x128xf32>
    %50 = tpu.matmul %47, %49, %cst_16 {dimension_numbers = #tpu.dot_dimension_numbers<[1], [0], [0], [1], [0, 0, 1, 1], [], []>} : vector<32x4xbf16>, vector<4x128xbf16>, vector<32x128xf32> -> vector<32x128xf32>
    %51 = arith.truncf %0 : vector<32x4xf32> to vector<32x4xbf16>
    %c1 = arith.constant 1 : index
    %c0_17 = arith.constant 0 : index
    %c0_18 = arith.constant 0 : index
    %52 = vector.load %arg3[%c1, %c0_17, %c0_18] : memref<3x4x128xbf16, #tpu.memory_space<vmem>>, vector<1x4x128xbf16>
    %53 = vector.shape_cast %52 : vector<1x4x128xbf16> to vector<4x128xbf16>
    %cst_19 = arith.constant dense<0.000000e+00> : vector<32x128xf32>
    %54 = tpu.matmul %51, %53, %cst_19 {dimension_numbers = #tpu.dot_dimension_numbers<[1], [0], [0], [1], [0, 0, 1, 1], [], []>} : vector<32x4xbf16>, vector<4x128xbf16>, vector<32x128xf32> -> vector<32x128xf32>
    %55 = arith.addf %50, %54 : vector<32x128xf32>
    %56 = arith.truncf %46 : vector<32x4xf32> to vector<32x4xbf16>
    %c2 = arith.constant 2 : index
    %c0_20 = arith.constant 0 : index
    %c0_21 = arith.constant 0 : index
    %57 = vector.load %arg3[%c2, %c0_20, %c0_21] : memref<3x4x128xbf16, #tpu.memory_space<vmem>>, vector<1x4x128xbf16>
    %58 = vector.shape_cast %57 : vector<1x4x128xbf16> to vector<4x128xbf16>
    %cst_22 = arith.constant dense<0.000000e+00> : vector<32x128xf32>
    %59 = tpu.matmul %56, %58, %cst_22 {dimension_numbers = #tpu.dot_dimension_numbers<[1], [0], [0], [1], [0, 0, 1, 1], [], []>} : vector<32x4xbf16>, vector<4x128xbf16>, vector<32x128xf32> -> vector<32x128xf32>
    %60 = arith.addf %55, %59 : vector<32x128xf32>
    %c0_23 = arith.constant 0 : index
    %c0_24 = arith.constant 0 : index
    %61 = vector.load %arg4[%c0_23, %c0_24] : memref<1x128xf32, #tpu.memory_space<vmem>>, vector<1x128xf32>
    %62 = vector.broadcast %61 : vector<1x128xf32> to vector<32x128xf32>
    %63 = arith.addf %60, %62 : vector<32x128xf32>
    %cst_25 = arith.constant 0.000000e+00 : f32
    %64 = vector.broadcast %cst_25 : f32 to vector<32x128xf32>
    %65 = arith.maximumf %63, %64 : vector<32x128xf32>
    %cst_26 = arith.constant 0.000000e+00 : f32
    %66 = vector.broadcast %cst_26 : f32 to vector<1x128xf32>
    %67 = tpu.iota {dimensions = array<i32: 0>} : vector<32x128xi32>
    %68 = vector.extract_strided_slice %65 {offsets = [0, 0], sizes = [31, 128], strides = [1, 1]} : vector<32x128xf32> to vector<31x128xf32>
    %69 = tpu.concatenate %66, %68 in 0 : vector<1x128xf32>, vector<31x128xf32> -> vector<32x128xf32>
    %c16_i32_27 = arith.constant 16 : i32
    %c0_i32_28 = arith.constant 0 : i32
    %70 = arith.cmpi eq, %c16_i32_27, %c0_i32_28 : i32
    %c1_i32_29 = arith.constant 1 : i32
    %71 = arith.select %70, %c1_i32_29, %c16_i32_27 : i32
    %72 = vector.broadcast %71 : i32 to vector<32x128xi32>
    %73 = arith.remsi %67, %72 : vector<32x128xi32>
    %c0_i32_30 = arith.constant 0 : i32
    %74 = vector.broadcast %c0_i32_30 : i32 to vector<32x128xi32>
    %75 = arith.cmpi ne, %73, %74 : vector<32x128xi32>
    %c0_i32_31 = arith.constant 0 : i32
    %76 = vector.broadcast %c0_i32_31 : i32 to vector<32x128xi32>
    %77 = arith.cmpi slt, %73, %76 : vector<32x128xi32>
    %c0_i32_32 = arith.constant 0 : i32
    %78 = arith.cmpi slt, %71, %c0_i32_32 : i32
    %79 = vector.broadcast %78 : i1 to vector<32x128xi1>
    %80 = vector.broadcast %79 : vector<32x128xi1> to vector<32x128xi1>
    %81 = arith.xori %77, %80 : vector<32x128xi1>
    %82 = arith.andi %81, %75 : vector<32x128xi1>
    %83 = vector.broadcast %71 : i32 to vector<32x128xi32>
    %84 = arith.addi %73, %83 : vector<32x128xi32>
    %85 = arith.select %82, %84, %73 : vector<32x128xi1>, vector<32x128xi32>
    %c0_i32_33 = arith.constant 0 : i32
    %86 = vector.broadcast %c0_i32_33 : i32 to vector<32x128xi32>
    %87 = arith.cmpi eq, %85, %86 : vector<32x128xi32>
    %cst_34 = arith.constant 0.000000e+00 : f32
    %88 = vector.broadcast %cst_34 : f32 to vector<32x128xf32>
    %89 = arith.select %87, %88, %69 : vector<32x128xi1>, vector<32x128xf32>
    %90 = vector.extract_strided_slice %65 {offsets = [1, 0], sizes = [31, 128], strides = [1, 1]} : vector<32x128xf32> to vector<31x128xf32>
    %91 = tpu.concatenate %90, %66 in 0 : vector<31x128xf32>, vector<1x128xf32> -> vector<32x128xf32>
    %c16_i32_35 = arith.constant 16 : i32
    %c0_i32_36 = arith.constant 0 : i32
    %92 = arith.cmpi eq, %c16_i32_35, %c0_i32_36 : i32
    %c1_i32_37 = arith.constant 1 : i32
    %93 = arith.select %92, %c1_i32_37, %c16_i32_35 : i32
    %94 = vector.broadcast %93 : i32 to vector<32x128xi32>
    %95 = arith.remsi %67, %94 : vector<32x128xi32>
    %c0_i32_38 = arith.constant 0 : i32
    %96 = vector.broadcast %c0_i32_38 : i32 to vector<32x128xi32>
    %97 = arith.cmpi ne, %95, %96 : vector<32x128xi32>
    %c0_i32_39 = arith.constant 0 : i32
    %98 = vector.broadcast %c0_i32_39 : i32 to vector<32x128xi32>
    %99 = arith.cmpi slt, %95, %98 : vector<32x128xi32>
    %c0_i32_40 = arith.constant 0 : i32
    %100 = arith.cmpi slt, %93, %c0_i32_40 : i32
    %101 = vector.broadcast %100 : i1 to vector<32x128xi1>
    %102 = vector.broadcast %101 : vector<32x128xi1> to vector<32x128xi1>
    %103 = arith.xori %99, %102 : vector<32x128xi1>
    %104 = arith.andi %103, %97 : vector<32x128xi1>
    %105 = vector.broadcast %93 : i32 to vector<32x128xi32>
    %106 = arith.addi %95, %105 : vector<32x128xi32>
    %107 = arith.select %104, %106, %95 : vector<32x128xi1>, vector<32x128xi32>
    %c15_i32_41 = arith.constant 15 : i32
    %108 = vector.broadcast %c15_i32_41 : i32 to vector<32x128xi32>
    %109 = arith.cmpi eq, %107, %108 : vector<32x128xi32>
    %cst_42 = arith.constant 0.000000e+00 : f32
    %110 = vector.broadcast %cst_42 : f32 to vector<32x128xf32>
    %111 = arith.select %109, %110, %91 : vector<32x128xi1>, vector<32x128xf32>
    %112 = arith.truncf %89 : vector<32x128xf32> to vector<32x128xbf16>
    %c0_43 = arith.constant 0 : index
    %c0_44 = arith.constant 0 : index
    %c0_45 = arith.constant 0 : index
    %113 = vector.load %arg5[%c0_43, %c0_44, %c0_45] : memref<3x128x128xbf16, #tpu.memory_space<vmem>>, vector<1x128x128xbf16>
    %114 = vector.shape_cast %113 : vector<1x128x128xbf16> to vector<128x128xbf16>
    %cst_46 = arith.constant dense<0.000000e+00> : vector<32x128xf32>
    %115 = tpu.matmul %112, %114, %cst_46 {dimension_numbers = #tpu.dot_dimension_numbers<[1], [0], [0], [1], [0, 0, 1, 1], [], []>} : vector<32x128xbf16>, vector<128x128xbf16>, vector<32x128xf32> -> vector<32x128xf32>
    %116 = arith.truncf %65 : vector<32x128xf32> to vector<32x128xbf16>
    %c1_47 = arith.constant 1 : index
    %c0_48 = arith.constant 0 : index
    %c0_49 = arith.constant 0 : index
    %117 = vector.load %arg5[%c1_47, %c0_48, %c0_49] : memref<3x128x128xbf16, #tpu.memory_space<vmem>>, vector<1x128x128xbf16>
    %118 = vector.shape_cast %117 : vector<1x128x128xbf16> to vector<128x128xbf16>
    %cst_50 = arith.constant dense<0.000000e+00> : vector<32x128xf32>
    %119 = tpu.matmul %116, %118, %cst_50 {dimension_numbers = #tpu.dot_dimension_numbers<[1], [0], [0], [1], [0, 0, 1, 1], [], []>} : vector<32x128xbf16>, vector<128x128xbf16>, vector<32x128xf32> -> vector<32x128xf32>
    %120 = arith.addf %115, %119 : vector<32x128xf32>
    %121 = arith.truncf %111 : vector<32x128xf32> to vector<32x128xbf16>
    %c2_51 = arith.constant 2 : index
    %c0_52 = arith.constant 0 : index
    %c0_53 = arith.constant 0 : index
    %122 = vector.load %arg5[%c2_51, %c0_52, %c0_53] : memref<3x128x128xbf16, #tpu.memory_space<vmem>>, vector<1x128x128xbf16>
    %123 = vector.shape_cast %122 : vector<1x128x128xbf16> to vector<128x128xbf16>
    %cst_54 = arith.constant dense<0.000000e+00> : vector<32x128xf32>
    %124 = tpu.matmul %121, %123, %cst_54 {dimension_numbers = #tpu.dot_dimension_numbers<[1], [0], [0], [1], [0, 0, 1, 1], [], []>} : vector<32x128xbf16>, vector<128x128xbf16>, vector<32x128xf32> -> vector<32x128xf32>
    %125 = arith.addf %120, %124 : vector<32x128xf32>
    %c0_55 = arith.constant 0 : index
    %c0_56 = arith.constant 0 : index
    %126 = vector.load %arg6[%c0_55, %c0_56] : memref<1x128xf32, #tpu.memory_space<vmem>>, vector<1x128xf32>
    %127 = vector.broadcast %126 : vector<1x128xf32> to vector<32x128xf32>
    %128 = arith.addf %125, %127 : vector<32x128xf32>
    %cst_57 = arith.constant 0.000000e+00 : f32
    %129 = vector.broadcast %cst_57 : f32 to vector<32x128xf32>
    %130 = arith.maximumf %128, %129 : vector<32x128xf32>
    %131 = vector.shape_cast %130 : vector<32x128xf32> to vector<2x16x128xf32>
    %cst_58 = arith.constant dense<0.000000e+00> : vector<2x128xf32>
    %132 = vector.multi_reduction <add>, %131, %cst_58 [1] : vector<2x16x128xf32> to vector<2x128xf32>
    %cst_59 = arith.constant 1.600000e+01 : f32
    %133 = vector.broadcast %cst_59 : f32 to vector<2x128xf32>
    %134 = arith.divf %132, %133 : vector<2x128xf32>
    %135 = arith.truncf %134 : vector<2x128xf32> to vector<2x128xbf16>
    %c0_60 = arith.constant 0 : index
    %c0_61 = arith.constant 0 : index
    %136 = vector.load %arg7[%c0_60, %c0_61] : memref<128x256xbf16, #tpu.memory_space<vmem>>, vector<128x256xbf16>
    %cst_62 = arith.constant dense<0.000000e+00> : vector<2x256xf32>
    %137 = tpu.matmul %135, %136, %cst_62 {dimension_numbers = #tpu.dot_dimension_numbers<[1], [0], [0], [1], [0, 0, 1, 1], [], []>} : vector<2x128xbf16>, vector<128x256xbf16>, vector<2x256xf32> -> vector<2x256xf32>
    %c0_63 = arith.constant 0 : index
    %c0_64 = arith.constant 0 : index
    %138 = vector.load %arg8[%c0_63, %c0_64] : memref<1x256xf32, #tpu.memory_space<vmem>>, vector<1x256xf32>
    %139 = vector.broadcast %138 : vector<1x256xf32> to vector<2x256xf32>
    %140 = arith.addf %137, %139 : vector<2x256xf32>
    %141 = vector.extract_strided_slice %140 {offsets = [0, 0], sizes = [2, 128], strides = [1, 1]} : vector<2x256xf32> to vector<2x128xf32>
    %142 = vector.extract_strided_slice %140 {offsets = [0, 128], sizes = [2, 128], strides = [1, 1]} : vector<2x256xf32> to vector<2x128xf32>
    %c0_65 = arith.constant 0 : index
    %c0_66 = arith.constant 0 : index
    %143 = vector.load %arg2[%c0_65, %c0_66] : memref<2x128xf32, #tpu.memory_space<vmem>>, vector<2x128xf32>
    %cst_67 = arith.constant 5.000000e-01 : f32
    %144 = vector.broadcast %cst_67 : f32 to vector<2x128xf32>
    %145 = arith.mulf %144, %142 : vector<2x128xf32>
    %146 = math.exp %145 : vector<2x128xf32>
    %147 = arith.mulf %143, %146 : vector<2x128xf32>
    %148 = arith.addf %141, %147 : vector<2x128xf32>
    %c0_68 = arith.constant 0 : index
    %c0_69 = arith.constant 0 : index
    %149 = vector.load %arg9[%c0_68, %c0_69] : memref<2x384xf32, #tpu.memory_space<vmem>>, vector<2x256xf32>
    tpu.vector_store %arg9[%c0_68, %c0_69], %140 {strides = array<i32>} : memref<2x384xf32, #tpu.memory_space<vmem>>, vector<2x256xf32>,
    %c0_70 = arith.constant 0 : index
    %c256 = arith.constant 256 : index
    %150 = vector.load %arg9[%c0_70, %c256] : memref<2x384xf32, #tpu.memory_space<vmem>>, vector<2x128xf32>
    tpu.vector_store %arg9[%c0_70, %c256], %148 {strides = array<i32>} : memref<2x384xf32, #tpu.memory_space<vmem>>, vector<2x128xf32>,
    return
  }
  func.func @transform_0(%arg0: i32) -> (i32, i32) {
    %c0_i32 = arith.constant 0 : i32
    %c0_i32_0 = arith.constant 0 : i32
    return %arg0, %c0_i32 : i32, i32
  }
  func.func @transform_1(%arg0: i32) -> (i32, i32) {
    %c0_i32 = arith.constant 0 : i32
    %c0_i32_0 = arith.constant 0 : i32
    return %arg0, %c0_i32 : i32, i32
  }
  func.func @transform_2(%arg0: i32) -> (i32, i32, i32) {
    %c0_i32 = arith.constant 0 : i32
    %c0_i32_0 = arith.constant 0 : i32
    %c0_i32_1 = arith.constant 0 : i32
    %c0_i32_2 = arith.constant 0 : i32
    return %c0_i32, %c0_i32_0, %c0_i32_1 : i32, i32, i32
  }
  func.func @transform_3(%arg0: i32) -> (i32, i32) {
    %c0_i32 = arith.constant 0 : i32
    %c0_i32_0 = arith.constant 0 : i32
    %c0_i32_1 = arith.constant 0 : i32
    return %c0_i32, %c0_i32_0 : i32, i32
  }
  func.func @transform_4(%arg0: i32) -> (i32, i32, i32) {
    %c0_i32 = arith.constant 0 : i32
    %c0_i32_0 = arith.constant 0 : i32
    %c0_i32_1 = arith.constant 0 : i32
    %c0_i32_2 = arith.constant 0 : i32
    return %c0_i32, %c0_i32_0, %c0_i32_1 : i32, i32, i32
  }
  func.func @transform_5(%arg0: i32) -> (i32, i32) {
    %c0_i32 = arith.constant 0 : i32
    %c0_i32_0 = arith.constant 0 : i32
    %c0_i32_1 = arith.constant 0 : i32
    return %c0_i32, %c0_i32_0 : i32, i32
  }
  func.func @transform_6(%arg0: i32) -> (i32, i32) {
    %c0_i32 = arith.constant 0 : i32
    %c0_i32_0 = arith.constant 0 : i32
    %c0_i32_1 = arith.constant 0 : i32
    return %c0_i32, %c0_i32_0 : i32, i32
  }
  func.func @transform_7(%arg0: i32) -> (i32, i32) {
    %c0_i32 = arith.constant 0 : i32
    %c0_i32_0 = arith.constant 0 : i32
    %c0_i32_1 = arith.constant 0 : i32
    return %c0_i32, %c0_i32_0 : i32, i32
  }
  func.func @transform_8(%arg0: i32) -> (i32, i32) {
    %c0_i32 = arith.constant 0 : i32
    %c0_i32_0 = arith.constant 0 : i32
    return %arg0, %c0_i32 : i32, i32
  }
}

</mosaic_0001>

<llo_original>
// kernel: tpu_custom_call.1
$region0: #{tpu_custom_call.1}
  #allocation0 [shape = 'u32[]', space=smem, size = 0x4, offset = 0x4, fixed_abs, tag = 'smem constant byte address 0x4 - core index']
  #allocation1 [shape = 'u32[144,128]{1,0:T(1,128)}', space=vmem, size = 0x12000, scoped, tag = 'internal scratch']
  %s0 = inlined_call_operand.vmem [shape: f32[32,4], index: 0, kind: input, shape index: {}]
  %s1 = inlined_call_operand.vmem [shape: f32[2,128], index: 1, kind: input, shape index: {}]
  %s2 = inlined_call_operand.vmem [shape: bf16[3,4,128], index: 2, kind: input, shape index: {}]
  %s3 = inlined_call_operand.vmem [shape: f32[1,128], index: 3, kind: input, shape index: {}]
  %s4 = inlined_call_operand.hbm [shape: bf16[3,128,128], index: 4, kind: input, shape index: {}]
  %s5 = inlined_call_operand.vmem [shape: f32[1,128], index: 5, kind: input, shape index: {}]
  %s6 = inlined_call_operand.hbm [shape: bf16[128,256], index: 6, kind: input, shape index: {}]
  %s7 = inlined_call_operand.vmem [shape: f32[1,256], index: 7, kind: input, shape index: {}]
  %s8 = inlined_call_operand.hbm [shape: f32[2,384], index: 8, kind: output, shape index: {}]
  %s9 = sld [smem:[#allocation0]]
  $region50: #{tpu_custom_call.1} parent=0
    _
  %s11 = ssub.s32 1, %s9
  %s12 = scalar_select 0, %s11, %s9
  $region1: #{tpu_custom_call.1} parent=0
    #allocation2 [shape = 'u8[98304]{0}', space=vmem, size = 0x18000, scoped, tag = 'input window, operand 4, single buffered']
    #allocation3 [shape = 's32[1]{0}', space=sflag, size = 0x4, scoped, tag = 'scoped memory for tpu_custom_call.1']
    #allocation4 [shape = 's32[1]{0}', space=sflag, size = 0x4, scoped, tag = 'scoped memory for tpu_custom_call.1']
    #allocation5 [shape = 'u8[65536]{0}', space=vmem, size = 0x10000, scoped, tag = 'input window, operand 6, single buffered']
    #allocation6 [shape = 's32[1]{0}', space=sflag, size = 0x4, scoped, tag = 'scoped memory for tpu_custom_call.1']
    #allocation7 [shape = 'u8[3072]{0}', space=vmem, size = 0xc00, scoped, tag = 'output window, operand 0, single buffered']
    %13 = vsyncpa [#allocation3], 0
    %14 = vsyncpa [#allocation6], 0
    %15 = vsyncpa [#allocation4], 0
    // Predicated region
    $region2: #{tpu_custom_call.1} parent=1 // pred_check
      _
    $region3: #{tpu_custom_call.1} parent=1 // pred_check_branch
      %17 = sbr.rel (0) target = $region5
    $region4: #{tpu_custom_call.1} parent=1 // pred_region
      _
    $region5: #{tpu_custom_call.1} parent=1 // pred_fallthru
      _
    // Predicated region
    $region6: #{tpu_custom_call.1} parent=1 // pred_check
      _
    $region7: #{tpu_custom_call.1} parent=1 // pred_check_branch
      %19 = sbr.rel (0) target = $region9
    $region8: #{tpu_custom_call.1} parent=1 // pred_region
      _
    $region9: #{tpu_custom_call.1} parent=1 // pred_fallthru
      _
    // Predicated region
    $region10: #{tpu_custom_call.1} parent=1 // pred_check
      _
    $region11: #{tpu_custom_call.1} parent=1 // pred_check_branch
      %21 = sbr.rel (0) target = $region13
    $region12: #{tpu_custom_call.1} parent=1 // pred_region
      _
    $region13: #{tpu_custom_call.1} parent=1 // pred_fallthru
      _
    // Predicated region
    $region14: #{tpu_custom_call.1} parent=1 // pred_check
      _
    $region15: #{tpu_custom_call.1} parent=1 // pred_check_branch
      %23 = sbr.rel (0) target = $region17
    $region16: #{tpu_custom_call.1} parent=1 // pred_region
      _
    $region17: #{tpu_custom_call.1} parent=1 // pred_fallthru
      _
    // Predicated region
    $region18: #{tpu_custom_call.1} parent=1 // pred_check
      _
    $region19: #{tpu_custom_call.1} parent=1 // pred_check_branch
      %25 = sbr.rel (0) target = $region21
    $region20: #{tpu_custom_call.1} parent=1 // pred_region
      %s27 = ssub.s32 3072, 3072
      %28 = vsyncadd [#allocation3], %s27
      %s29 = sshll.u32 [#allocation2], 4
      %s30 = int_to_ptr.vmem [resolvable:$true] %s29
      %35 = dma.hbm_to_vmem [thread:$0]  %s4, 3072, %s30, [#allocation3], 64, 64, 4
    $region21: #{tpu_custom_call.1} parent=1 // pred_fallthru
      _
    // Predicated region
    $region22: #{tpu_custom_call.1} parent=1 // pred_check
      _
    $region23: #{tpu_custom_call.1} parent=1 // pred_check_branch
      %37 = sbr.rel (0) target = $region25
    $region24: #{tpu_custom_call.1} parent=1 // pred_region
      _
    $region25: #{tpu_custom_call.1} parent=1 // pred_fallthru
      _
    // Predicated region
    $region26: #{tpu_custom_call.1} parent=1 // pred_check
      _
    $region27: #{tpu_custom_call.1} parent=1 // pred_check_branch
      %39 = sbr.rel (0) target = $region29
    $region28: #{tpu_custom_call.1} parent=1 // pred_region
      %s41 = ssub.s32 2048, 2048
      %42 = vsyncadd [#allocation6], %s41
      %s43 = sshll.u32 [#allocation5], 4
      %s44 = int_to_ptr.vmem [resolvable:$true] %s43
      %49 = dma.hbm_to_vmem [thread:$0]  %s6, 2048, %s44, [#allocation6], 128, 128, 8
    $region29: #{tpu_custom_call.1} parent=1 // pred_fallthru
      _
    // Predicated region
    $region30: #{tpu_custom_call.1} parent=1 // pred_check
      _
    $region31: #{tpu_custom_call.1} parent=1 // pred_check_branch
      %51 = sbr.rel (0) target = $region33
    $region32: #{tpu_custom_call.1} parent=1 // pred_region
      _
    $region33: #{tpu_custom_call.1} parent=1 // pred_fallthru
      _
    // Predicated region
    $region34: #{tpu_custom_call.1} parent=1 // pred_check
      _
    $region35: #{tpu_custom_call.1} parent=1 // pred_check_branch
      %53 = sbr.rel (0) target = $region37
    $region36: #{tpu_custom_call.1} parent=1 // pred_region
      %54 = dma.done [#allocation3], 3072
    $region37: #{tpu_custom_call.1} parent=1 // pred_fallthru
      _
    // Predicated region
    $region38: #{tpu_custom_call.1} parent=1 // pred_check
      _
    $region39: #{tpu_custom_call.1} parent=1 // pred_check_branch
      %56 = sbr.rel (0) target = $region41
    $region40: #{tpu_custom_call.1} parent=1 // pred_region
      %57 = dma.done [#allocation6], 2048
    $region41: #{tpu_custom_call.1} parent=1 // pred_fallthru
      _
    %v59 = vld [vmem:[%s0] sm:$0xff]
    %v60 = vld [vmem:[%s0 + $0x8] sm:$0xff]
    %v61 = vld [vmem:[%s0 + $0x10] sm:$0xff]
    %v62 = vld [vmem:[%s0 + $0x18] sm:$0xff]
    %v63 = vlaneseq
    %v64 = vshrl.u32 %v63, 7
    %v65 = vadd.s32 %v64, 8
    %v66 = vadd.s32 %v64, 16
    %v67 = vadd.s32 %v64, 24
    %vm72 = vcmask 1040384
    %v73 = vrot.slane %v59, 7
    %v74 = vrot.slane %v60, 7
    %v75 = vsel %vm72, %v73, %v74
    %v76 = vrot.slane %v61, 7
    %v77 = vsel %vm72, %v74, %v76
    %v78 = vrot.slane %v62, 7
    %v79 = vsel %vm72, %v76, %v78
    %v84 = vsel %vm72, 0.0, %v73
    %vm85 = vcmp.lt.s32.totalorder %v64, 0
    %v86 = vsub.s32 0, %v64
    %v87 = vsel %vm85, %v86, %v64
    %v88 = vshrl.u32 %v87, 4
    %v89 = vand.u32 %v87, 15
    %v90 = vsub.s32 0, %v89
    %v91 = vsel %vm85, %v90, %v89
    %vm92 = vcmp.lt.s32.totalorder %v65, 0
    %v93 = vsub.s32 0, %v65
    %v94 = vsel %vm92, %v93, %v65
    %v95 = vshrl.u32 %v94, 4
    %v96 = vand.u32 %v94, 15
    %v97 = vsub.s32 0, %v96
    %v98 = vsel %vm92, %v97, %v96
    %vm99 = vcmp.lt.s32.totalorder %v66, 0
    %v100 = vsub.s32 0, %v66
    %v101 = vsel %vm99, %v100, %v66
    %v102 = vshrl.u32 %v101, 4
    %v103 = vand.u32 %v101, 15
    %v104 = vsub.s32 0, %v103
    %v105 = vsel %vm99, %v104, %v103
    %vm106 = vcmp.lt.s32.totalorder %v67, 0
    %v107 = vsub.s32 0, %v67
    %v108 = vsel %vm106, %v107, %v67
    %v109 = vshrl.u32 %v108, 4
    %v110 = vand.u32 %v108, 15
    %v111 = vsub.s32 0, %v110
    %v112 = vsel %vm106, %v111, %v110
    %vm113 = vcmp.ne.s32.totalorder %v91, 0
    %vm114 = vcmp.ne.s32.totalorder %v98, 0
    %vm115 = vcmp.ne.s32.totalorder %v105, 0
    %vm116 = vcmp.ne.s32.totalorder %v112, 0
    %vm117 = vcmp.lt.s32.totalorder %v91, 0
    %vm118 = vcmp.lt.s32.totalorder %v98, 0
    %vm119 = vcmp.lt.s32.totalorder %v105, 0
    %vm120 = vcmp.lt.s32.totalorder %v112, 0
    %vm121 = vmand %vm117, %vm113
    %vm122 = vmand %vm118, %vm114
    %vm123 = vmand %vm119, %vm115
    %vm124 = vmand %vm120, %vm116
    %v125 = vadd.s32 %v91, 16
    %v126 = vadd.s32 %v98, 16
    %v127 = vadd.s32 %v105, 16
    %v128 = vadd.s32 %v112, 16
    %v129 = vsel %vm121, %v125, %v91
    %v130 = vsel %vm122, %v126, %v98
    %v131 = vsel %vm123, %v127, %v105
    %v132 = vsel %vm124, %v128, %v112
    %vm133 = vcmp.eq.s32.totalorder %v129, 0
    %vm134 = vcmp.eq.s32.totalorder %v130, 0
    %vm135 = vcmp.eq.s32.totalorder %v131, 0
    %vm136 = vcmp.eq.s32.totalorder %v132, 0
    %v137 = vsel %vm133, 0.0, %v84
    %v138 = vsel %vm134, 0.0, %v75
    %v139 = vsel %vm135, 0.0, %v77
    %v140 = vsel %vm136, 0.0, %v79
    %vm141 = vcmask 1046528
    %v142 = vrot.slane %v59, 1
    %v143 = vrot.slane %v60, 1
    %v144 = vsel %vm141, %v142, %v143
    %v145 = vrot.slane %v61, 1
    %v146 = vsel %vm141, %v143, %v145
    %v147 = vrot.slane %v62, 1
    %v148 = vsel %vm141, %v145, %v147
    %v153 = vsel %vm141, %v147, 0.0
    %vm154 = vcmp.eq.s32.totalorder %v129, 15
    %vm155 = vcmp.eq.s32.totalorder %v130, 15
    %vm156 = vcmp.eq.s32.totalorder %v131, 15
    %vm157 = vcmp.eq.s32.totalorder %v132, 15
    %v158 = vsel %vm154, 0.0, %v144
    %v159 = vsel %vm155, 0.0, %v146
    %v160 = vsel %vm156, 0.0, %v148
    %v161 = vsel %vm157, 0.0, %v153
    %v162 = vpack.c.bf16 %v138, %v137
    %v163 = vpack.c.bf16 %v140, %v139
    %v164 = vld [vmem:[%s2] sm:$0x3]
    %v165 = vpack.c.bf16 %v60, %v59
    %v166 = vpack.c.bf16 %v62, %v61
    %s167 = scalar_lea.vmem %s2, 2
    %v168 = vld [vmem:[%s167] sm:$0x3]
    %vm169 = vcmask 31744
    %v171 = vsel %vm169, %v165, 0
    %v174 = vsel %vm169, %v166, 0
    %vm176 = vcmask 1041408
    %v178 = vsel %vm176, %v168, 0
    %180 = vmatprep.subr.bf16.mxu0 0
    %181 = vmatpush1.bf16.msra.mxu0 %v178
    %182 = vmatprep.subr.bf16.mxu0 0
    %183 = vmatpush1.bf16.msra.mxu0 0
    %184 = vmatprep.subr.bf16.mxu0 0
    %185 = vmatpush1.bf16.msra.mxu0 0
    %186 = vmatprep.subr.bf16.mxu0 0
    %187 = vmatpush1.bf16.msra.mxu0 0
    %188 = vmatprep.subr.bf16.mxu0 0
    %189 = vmatpush1.bf16.msra.mxu0 0
    %190 = vmatprep.subr.bf16.mxu0 0
    %191 = vmatpush1.bf16.msra.mxu0 0
    %192 = vmatprep.subr.bf16.mxu0 0
    %193 = vmatpush1.bf16.msra.mxu0 0
    %194 = vmatprep.subr.bf16.mxu0 0
    %195 = vmatpush1.bf16.msra.mxu0 0
    %196 = vmatprep.subr.bf16.mxu0 0
    %197 = vmatpush1.bf16.msra.mxu0 0
    %198 = vmatprep.subr.bf16.mxu0 0
    %199 = vmatpush1.bf16.msra.mxu0 0
    %200 = vmatprep.subr.bf16.mxu0 0
    %201 = vmatpush1.bf16.msra.mxu0 0
    %202 = vmatprep.subr.bf16.mxu0 0
    %203 = vmatpush1.bf16.msra.mxu0 0
    %204 = vmatprep.subr.bf16.mxu0 0
    %205 = vmatpush1.bf16.msra.mxu0 0
    %206 = vmatprep.subr.bf16.mxu0 0
    %207 = vmatpush1.bf16.msra.mxu0 0
    %208 = vmatprep.subr.bf16.mxu0 0
    %209 = vmatpush1.bf16.msra.mxu0 0
    %210 = vmatprep.subr.bf16.mxu0 0
    %211 = vmatpush1.bf16.msra.mxu0 0
    %212 = vmatprep.mubr.bf16.mxu0 0
    %213 = vmatmul.mubr.bf16.gmra.mrb[0].mxu0 %v171
    %v214 = vpop.f32.mrb[0].mxu0
    %v215 = vadd.f32 0.0, %v214
    %v216 = vpop.f32.mrb[0].mxu0
    %v217 = vpop.f32.mrb[0].mxu0
    %v218 = vadd.f32 0.0, %v217
    %v219 = vpop.f32.mrb[0].mxu0
    %220 = vmatprep.mubr.bf16.mxu0 0
    %221 = vmatmul.mubr.bf16.gmra.mrb[0].mxu0 %v174
    %v222 = vpop.f32.mrb[0].mxu0
    %v223 = vadd.f32 0.0, %v222
    %v224 = vpop.f32.mrb[0].mxu0
    %v225 = vpop.f32.mrb[0].mxu0
    %v226 = vadd.f32 0.0, %v225
    %v227 = vpop.f32.mrb[0].mxu0
    %228 = vdwg.mxu0
    %v230 = vsel %vm169, %v162, 0
    %v233 = vsel %vm169, %v163, 0
    %v236 = vsel %vm176, %v164, 0
    %238 = vmatprep.subr.bf16.mxu0 0
    %239 = vmatpush1.bf16.msra.mxu0 %v236
    %240 = vmatprep.subr.bf16.mxu0 0
    %241 = vmatpush1.bf16.msra.mxu0 0
    %242 = vmatprep.subr.bf16.mxu0 0
    %243 = vmatpush1.bf16.msra.mxu0 0
    %244 = vmatprep.subr.bf16.mxu0 0
    %245 = vmatpush1.bf16.msra.mxu0 0
    %246 = vmatprep.subr.bf16.mxu0 0
    %247 = vmatpush1.bf16.msra.mxu0 0
    %248 = vmatprep.subr.bf16.mxu0 0
    %249 = vmatpush1.bf16.msra.mxu0 0
    %250 = vmatprep.subr.bf16.mxu0 0
    %251 = vmatpush1.bf16.msra.mxu0 0
    %252 = vmatprep.subr.bf16.mxu0 0
    %253 = vmatpush1.bf16.msra.mxu0 0
    %254 = vmatprep.subr.bf16.mxu0 0
    %255 = vmatpush1.bf16.msra.mxu0 0
    %256 = vmatprep.subr.bf16.mxu0 0
    %257 = vmatpush1.bf16.msra.mxu0 0
    %258 = vmatprep.subr.bf16.mxu0 0
    %259 = vmatpush1.bf16.msra.mxu0 0
    %260 = vmatprep.subr.bf16.mxu0 0
    %261 = vmatpush1.bf16.msra.mxu0 0
    %262 = vmatprep.subr.bf16.mxu0 0
    %263 = vmatpush1.bf16.msra.mxu0 0
    %264 = vmatprep.subr.bf16.mxu0 0
    %265 = vmatpush1.bf16.msra.mxu0 0
    %266 = vmatprep.subr.bf16.mxu0 0
    %267 = vmatpush1.bf16.msra.mxu0 0
    %268 = vmatprep.subr.bf16.mxu0 0
    %269 = vmatpush1.bf16.msra.mxu0 0
    %270 = vmatprep.mubr.bf16.mxu0 0
    %271 = vmatmul.mubr.bf16.gmra.mrb[0].mxu0 %v230
    %v272 = vpop.f32.mrb[0].mxu0
    %v273 = vadd.f32 %v215, %v272
    %v274 = vpop.f32.mrb[0].mxu0
    %v275 = vpop.f32.mrb[0].mxu0
    %v276 = vadd.f32 %v218, %v275
    %v277 = vpop.f32.mrb[0].mxu0
    %278 = vmatprep.mubr.bf16.mxu0 0
    %279 = vmatmul.mubr.bf16.gmra.mrb[0].mxu0 %v233
    %v280 = vpop.f32.mrb[0].mxu0
    %v281 = vadd.f32 %v223, %v280
    %v282 = vpop.f32.mrb[0].mxu0
    %v283 = vpop.f32.mrb[0].mxu0
    %v284 = vadd.f32 %v226, %v283
    %v285 = vpop.f32.mrb[0].mxu0
    %286 = vdwg.mxu0
    %v287 = vpack.c.bf16 %v159, %v158
    %v288 = vpack.c.bf16 %v161, %v160
    %s289 = scalar_lea.vmem %s2, 4
    %v290 = vld [vmem:[%s289] sm:$0x3]
    %v292 = vsel %vm169, %v287, 0
    %v295 = vsel %vm169, %v288, 0
    %v298 = vsel %vm176, %v290, 0
    %300 = vmatprep.subr.bf16.mxu0 0
    %301 = vmatpush1.bf16.msra.mxu0 %v298
    %302 = vmatprep.subr.bf16.mxu0 0
    %303 = vmatpush1.bf16.msra.mxu0 0
    %304 = vmatprep.subr.bf16.mxu0 0
    %305 = vmatpush1.bf16.msra.mxu0 0
    %306 = vmatprep.subr.bf16.mxu0 0
    %307 = vmatpush1.bf16.msra.mxu0 0
    %308 = vmatprep.subr.bf16.mxu0 0
    %309 = vmatpush1.bf16.msra.mxu0 0
    %310 = vmatprep.subr.bf16.mxu0 0
    %311 = vmatpush1.bf16.msra.mxu0 0
    %312 = vmatprep.subr.bf16.mxu0 0
    %313 = vmatpush1.bf16.msra.mxu0 0
    %314 = vmatprep.subr.bf16.mxu0 0
    %315 = vmatpush1.bf16.msra.mxu0 0
    %316 = vmatprep.subr.bf16.mxu0 0
    %317 = vmatpush1.bf16.msra.mxu0 0
    %318 = vmatprep.subr.bf16.mxu0 0
    %319 = vmatpush1.bf16.msra.mxu0 0
    %320 = vmatprep.subr.bf16.mxu0 0
    %321 = vmatpush1.bf16.msra.mxu0 0
    %322 = vmatprep.subr.bf16.mxu0 0
    %323 = vmatpush1.bf16.msra.mxu0 0
    %324 = vmatprep.subr.bf16.mxu0 0
    %325 = vmatpush1.bf16.msra.mxu0 0
    %326 = vmatprep.subr.bf16.mxu0 0
    %327 = vmatpush1.bf16.msra.mxu0 0
    %328 = vmatprep.subr.bf16.mxu0 0
    %329 = vmatpush1.bf16.msra.mxu0 0
    %330 = vmatprep.subr.bf16.mxu0 0
    %331 = vmatpush1.bf16.msra.mxu0 0
    %332 = vmatprep.mubr.bf16.mxu0 0
    %333 = vmatmul.mubr.bf16.gmra.mrb[0].mxu0 %v292
    %v334 = vpop.f32.mrb[0].mxu0
    %v335 = vadd.f32 0.0, %v334
    %v336 = vpop.f32.mrb[0].mxu0
    %v337 = vpop.f32.mrb[0].mxu0
    %v338 = vadd.f32 0.0, %v337
    %v339 = vpop.f32.mrb[0].mxu0
    %340 = vmatprep.mubr.bf16.mxu0 0
    %341 = vmatmul.mubr.bf16.gmra.mrb[0].mxu0 %v295
    %v342 = vpop.f32.mrb[0].mxu0
    %v343 = vadd.f32 0.0, %v342
    %v344 = vpop.f32.mrb[0].mxu0
    %v345 = vpop.f32.mrb[0].mxu0
    %v346 = vadd.f32 0.0, %v345
    %v347 = vpop.f32.mrb[0].mxu0
    %348 = vdwg.mxu0
    %v349 = vadd.f32 %v273, %v335
    %v350 = vadd.f32 %v276, %v338
    %v351 = vadd.f32 %v281, %v343
    %v352 = vadd.f32 %v284, %v346
    %v353 = vld [vmem:[%s3] sm:$0x1]
    %v355 = vlaneseq
    %v356 = vshrl.u32 %v355, 7
    %v357 = vsub.s32 0, %v356
    %v358 = vrot.slane %v353, %v357
    %v360 = vadd.f32 %v349, %v358
    %v361 = vadd.f32 %v350, %v358
    %v362 = vadd.f32 %v351, %v358
    %v363 = vadd.f32 %v352, %v358
    %v364 = vmax.f32 %v360, 0.0
    %v365 = vmax.f32 %v361, 0.0
    %v366 = vmax.f32 %v362, 0.0
    %v367 = vmax.f32 %v363, 0.0
    %v372 = vrot.slane %v364, 7
    %v373 = vrot.slane %v365, 7
    %v374 = vsel %vm72, %v372, %v373
    %v375 = vrot.slane %v366, 7
    %v376 = vsel %vm72, %v373, %v375
    %v377 = vrot.slane %v367, 7
    %v378 = vsel %vm72, %v375, %v377
    %v383 = vsel %vm72, 0.0, %v372
    %v384 = vsel %vm133, 0.0, %v383
    %v385 = vsel %vm134, 0.0, %v374
    %v386 = vsel %vm135, 0.0, %v376
    %v387 = vsel %vm136, 0.0, %v378
    %v388 = vrot.slane %v364, 1
    %v389 = vrot.slane %v365, 1
    %v390 = vsel %vm141, %v388, %v389
    %v391 = vrot.slane %v366, 1
    %v392 = vsel %vm141, %v389, %v391
    %v393 = vrot.slane %v367, 1
    %v394 = vsel %vm141, %v391, %v393
    %v399 = vsel %vm141, %v393, 0.0
    %v400 = vsel %vm154, 0.0, %v390
    %v401 = vsel %vm155, 0.0, %v392
    %v402 = vsel %vm156, 0.0, %v394
    %v403 = vsel %vm157, 0.0, %v399
    %v404 = vpack.c.bf16 %v385, %v384
    %v405 = vpack.c.bf16 %v387, %v386
    %v406 = vld [vmem:[#allocation2] sm:$0xf]
    %v407 = vld [vmem:[#allocation2 + $0x4] sm:$0xf]
    %v408 = vld [vmem:[#allocation2 + $0x8] sm:$0xf]
    %v409 = vld [vmem:[#allocation2 + $0xc] sm:$0xf]
    %v410 = vld [vmem:[#allocation2 + $0x10] sm:$0xf]
    %v411 = vld [vmem:[#allocation2 + $0x14] sm:$0xf]
    %v412 = vld [vmem:[#allocation2 + $0x18] sm:$0xf]
    %v413 = vld [vmem:[#allocation2 + $0x1c] sm:$0xf]
    %v414 = vld [vmem:[#allocation2 + $0x20] sm:$0xf]
    %v415 = vld [vmem:[#allocation2 + $0x24] sm:$0xf]
    %v416 = vld [vmem:[#allocation2 + $0x28] sm:$0xf]
    %v417 = vld [vmem:[#allocation2 + $0x2c] sm:$0xf]
    %v418 = vld [vmem:[#allocation2 + $0x30] sm:$0xf]
    %v419 = vld [vmem:[#allocation2 + $0x34] sm:$0xf]
    %v420 = vld [vmem:[#allocation2 + $0x38] sm:$0xf]
    %v421 = vld [vmem:[#allocation2 + $0x3c] sm:$0xf]
    %v422 = vpack.c.bf16 %v365, %v364
    %v423 = vpack.c.bf16 %v367, %v366
    %s424 = scalar_lea.vmem [#allocation2], 64
    %v425 = vld [vmem:[%s424] sm:$0xf]
    %v426 = vld [vmem:[%s424 + $0x4] sm:$0xf]
    %v427 = vld [vmem:[%s424 + $0x8] sm:$0xf]
    %v428 = vld [vmem:[%s424 + $0xc] sm:$0xf]
    %v429 = vld [vmem:[%s424 + $0x10] sm:$0xf]
    %v430 = vld [vmem:[%s424 + $0x14] sm:$0xf]
    %v431 = vld [vmem:[%s424 + $0x18] sm:$0xf]
    %v432 = vld [vmem:[%s424 + $0x1c] sm:$0xf]
    %v433 = vld [vmem:[%s424 + $0x20] sm:$0xf]
    %v434 = vld [vmem:[%s424 + $0x24] sm:$0xf]
    %v435 = vld [vmem:[%s424 + $0x28] sm:$0xf]
    %v436 = vld [vmem:[%s424 + $0x2c] sm:$0xf]
    %v437 = vld [vmem:[%s424 + $0x30] sm:$0xf]
    %v438 = vld [vmem:[%s424 + $0x34] sm:$0xf]
    %v439 = vld [vmem:[%s424 + $0x38] sm:$0xf]
    %v440 = vld [vmem:[%s424 + $0x3c] sm:$0xf]
    %v457 = vunpack.c.l.b16 %v425
    %v458 = vunpack.c.l.b16 %v426
    %v459 = vunpack.c.l.b16 %v427
    %v460 = vunpack.c.l.b16 %v428
    %v461 = vunpack.c.l.b16 %v429
    %v462 = vunpack.c.l.b16 %v430
    %v463 = vunpack.c.l.b16 %v431
    %v464 = vunpack.c.l.b16 %v432
    %v465 = vunpack.c.l.b16 %v433
    %v466 = vunpack.c.l.b16 %v434
    %v467 = vunpack.c.l.b16 %v435
    %v468 = vunpack.c.l.b16 %v436
    %v469 = vunpack.c.l.b16 %v437
    %v470 = vunpack.c.l.b16 %v438
    %v471 = vunpack.c.l.b16 %v439
    %v472 = vunpack.c.l.b16 %v440
    %v473 = vpack.c.b16 %v458, %v457
    %v474 = vpack.c.b16 %v460, %v459
    %v475 = vpack.c.b16 %v462, %v461
    %v476 = vpack.c.b16 %v464, %v463
    %v477 = vpack.c.b16 %v466, %v465
    %v478 = vpack.c.b16 %v468, %v467
    %v479 = vpack.c.b16 %v470, %v469
    %v480 = vpack.c.b16 %v472, %v471
    %489 = vmatprep.subr.bf16.mxu0 0
    %490 = vmatpush1.bf16.msra.mxu0 %v473
    %491 = vmatprep.subr.bf16.mxu0 0
    %492 = vmatpush1.bf16.msra.mxu0 %v474
    %493 = vmatprep.subr.bf16.mxu0 0
    %494 = vmatpush1.bf16.msra.mxu0 %v475
    %495 = vmatprep.subr.bf16.mxu0 0
    %496 = vmatpush1.bf16.msra.mxu0 %v476
    %497 = vmatprep.subr.bf16.mxu0 0
    %498 = vmatpush1.bf16.msra.mxu0 %v477
    %499 = vmatprep.subr.bf16.mxu0 0
    %500 = vmatpush1.bf16.msra.mxu0 %v478
    %501 = vmatprep.subr.bf16.mxu0 0
    %502 = vmatpush1.bf16.msra.mxu0 %v479
    %503 = vmatprep.subr.bf16.mxu0 0
    %504 = vmatpush1.bf16.msra.mxu0 %v480
    %505 = vmatprep.subr.bf16.mxu0 0
    %506 = vmatpush1.bf16.msra.mxu0 0
    %507 = vmatprep.subr.bf16.mxu0 0
    %508 = vmatpush1.bf16.msra.mxu0 0
    %509 = vmatprep.subr.bf16.mxu0 0
    %510 = vmatpush1.bf16.msra.mxu0 0
    %511 = vmatprep.subr.bf16.mxu0 0
    %512 = vmatpush1.bf16.msra.mxu0 0
    %513 = vmatprep.subr.bf16.mxu0 0
    %514 = vmatpush1.bf16.msra.mxu0 0
    %515 = vmatprep.subr.bf16.mxu0 0
    %516 = vmatpush1.bf16.msra.mxu0 0
    %517 = vmatprep.subr.bf16.mxu0 0
    %518 = vmatpush1.bf16.msra.mxu0 0
    %519 = vmatprep.subr.bf16.mxu0 0
    %520 = vmatpush1.bf16.msra.mxu0 0
    %521 = vmatprep.mubr.bf16.mxu0 0
    %522 = vmatmul.mubr.bf16.gmra.mrb[0].mxu0 %v422
    %v523 = vpop.f32.mrb[0].mxu0
    %v524 = vadd.f32 0.0, %v523
    %v525 = vpop.f32.mrb[0].mxu0
    %v526 = vpop.f32.mrb[0].mxu0
    %v527 = vadd.f32 0.0, %v526
    %v528 = vpop.f32.mrb[0].mxu0
    %529 = vmatprep.mubr.bf16.mxu0 0
    %530 = vmatmul.mubr.bf16.gmra.mrb[0].mxu0 %v423
    %v531 = vpop.f32.mrb[0].mxu0
    %v532 = vadd.f32 0.0, %v531
    %v533 = vpop.f32.mrb[0].mxu0
    %v534 = vpop.f32.mrb[0].mxu0
    %v535 = vadd.f32 0.0, %v534
    %v536 = vpop.f32.mrb[0].mxu0
    %537 = vdwg.mxu0
    %v554 = vunpack.c.l.b16 %v406
    %v555 = vunpack.c.l.b16 %v407
    %v556 = vunpack.c.l.b16 %v408
    %v557 = vunpack.c.l.b16 %v409
    %v558 = vunpack.c.l.b16 %v410
    %v559 = vunpack.c.l.b16 %v411
    %v560 = vunpack.c.l.b16 %v412
    %v561 = vunpack.c.l.b16 %v413
    %v562 = vunpack.c.l.b16 %v414
    %v563 = vunpack.c.l.b16 %v415
    %v564 = vunpack.c.l.b16 %v416
    %v565 = vunpack.c.l.b16 %v417
    %v566 = vunpack.c.l.b16 %v418
    %v567 = vunpack.c.l.b16 %v419
    %v568 = vunpack.c.l.b16 %v420
    %v569 = vunpack.c.l.b16 %v421
    %v570 = vpack.c.b16 %v555, %v554
    %v571 = vpack.c.b16 %v557, %v556
    %v572 = vpack.c.b16 %v559, %v558
    %v573 = vpack.c.b16 %v561, %v560
    %v574 = vpack.c.b16 %v563, %v562
    %v575 = vpack.c.b16 %v565, %v564
    %v576 = vpack.c.b16 %v567, %v566
    %v577 = vpack.c.b16 %v569, %v568
    %586 = vmatprep.subr.bf16.mxu0 0
    %587 = vmatpush1.bf16.msra.mxu0 %v570
    %588 = vmatprep.subr.bf16.mxu0 0
    %589 = vmatpush1.bf16.msra.mxu0 %v571
    %590 = vmatprep.subr.bf16.mxu0 0
    %591 = vmatpush1.bf16.msra.mxu0 %v572
    %592 = vmatprep.subr.bf16.mxu0 0
    %593 = vmatpush1.bf16.msra.mxu0 %v573
    %594 = vmatprep.subr.bf16.mxu0 0
    %595 = vmatpush1.bf16.msra.mxu0 %v574
    %596 = vmatprep.subr.bf16.mxu0 0
    %597 = vmatpush1.bf16.msra.mxu0 %v575
    %598 = vmatprep.subr.bf16.mxu0 0
    %599 = vmatpush1.bf16.msra.mxu0 %v576
    %600 = vmatprep.subr.bf16.mxu0 0
    %601 = vmatpush1.bf16.msra.mxu0 %v577
    %602 = vmatprep.subr.bf16.mxu0 0
    %603 = vmatpush1.bf16.msra.mxu0 0
    %604 = vmatprep.subr.bf16.mxu0 0
    %605 = vmatpush1.bf16.msra.mxu0 0
    %606 = vmatprep.subr.bf16.mxu0 0
    %607 = vmatpush1.bf16.msra.mxu0 0
    %608 = vmatprep.subr.bf16.mxu0 0
    %609 = vmatpush1.bf16.msra.mxu0 0
    %610 = vmatprep.subr.bf16.mxu0 0
    %611 = vmatpush1.bf16.msra.mxu0 0
    %612 = vmatprep.subr.bf16.mxu0 0
    %613 = vmatpush1.bf16.msra.mxu0 0
    %614 = vmatprep.subr.bf16.mxu0 0
    %615 = vmatpush1.bf16.msra.mxu0 0
    %616 = vmatprep.subr.bf16.mxu0 0
    %617 = vmatpush1.bf16.msra.mxu0 0
    %618 = vmatprep.mubr.bf16.mxu0 0
    %619 = vmatmul.mubr.bf16.gmra.mrb[0].mxu0 %v404
    %v620 = vpop.f32.mrb[0].mxu0
    %v621 = vadd.f32 %v524, %v620
    %v622 = vpop.f32.mrb[0].mxu0
    %v623 = vpop.f32.mrb[0].mxu0
    %v624 = vadd.f32 %v527, %v623
    %v625 = vpop.f32.mrb[0].mxu0
    %626 = vmatprep.mubr.bf16.mxu0 0
    %627 = vmatmul.mubr.bf16.gmra.mrb[0].mxu0 %v405
    %v628 = vpop.f32.mrb[0].mxu0
    %v629 = vadd.f32 %v532, %v628
    %v630 = vpop.f32.mrb[0].mxu0
    %v631 = vpop.f32.mrb[0].mxu0
    %v632 = vadd.f32 %v535, %v631
    %v633 = vpop.f32.mrb[0].mxu0
    %634 = vdwg.mxu0
    %v635 = vpack.c.bf16 %v401, %v400
    %v636 = vpack.c.bf16 %v403, %v402
    %s637 = scalar_lea.vmem [#allocation2], 128
    %v638 = vld [vmem:[%s637] sm:$0xf]
    %v639 = vld [vmem:[%s637 + $0x4] sm:$0xf]
    %v640 = vld [vmem:[%s637 + $0x8] sm:$0xf]
    %v641 = vld [vmem:[%s637 + $0xc] sm:$0xf]
    %v642 = vld [vmem:[%s637 + $0x10] sm:$0xf]
    %v643 = vld [vmem:[%s637 + $0x14] sm:$0xf]
    %v644 = vld [vmem:[%s637 + $0x18] sm:$0xf]
    %v645 = vld [vmem:[%s637 + $0x1c] sm:$0xf]
    %v646 = vld [vmem:[%s637 + $0x20] sm:$0xf]
    %v647 = vld [vmem:[%s637 + $0x24] sm:$0xf]
    %v648 = vld [vmem:[%s637 + $0x28] sm:$0xf]
    %v649 = vld [vmem:[%s637 + $0x2c] sm:$0xf]
    %v650 = vld [vmem:[%s637 + $0x30] sm:$0xf]
    %v651 = vld [vmem:[%s637 + $0x34] sm:$0xf]
    %v652 = vld [vmem:[%s637 + $0x38] sm:$0xf]
    %v653 = vld [vmem:[%s637 + $0x3c] sm:$0xf]
    %v670 = vunpack.c.l.b16 %v638
    %v671 = vunpack.c.l.b16 %v639
    %v672 = vunpack.c.l.b16 %v640
    %v673 = vunpack.c.l.b16 %v641
    %v674 = vunpack.c.l.b16 %v642
    %v675 = vunpack.c.l.b16 %v643
    %v676 = vunpack.c.l.b16 %v644
    %v677 = vunpack.c.l.b16 %v645
    %v678 = vunpack.c.l.b16 %v646
    %v679 = vunpack.c.l.b16 %v647
    %v680 = vunpack.c.l.b16 %v648
    %v681 = vunpack.c.l.b16 %v649
    %v682 = vunpack.c.l.b16 %v650
    %v683 = vunpack.c.l.b16 %v651
    %v684 = vunpack.c.l.b16 %v652
    %v685 = vunpack.c.l.b16 %v653
    %v686 = vpack.c.b16 %v671, %v670
    %v687 = vpack.c.b16 %v673, %v672
    %v688 = vpack.c.b16 %v675, %v674
    %v689 = vpack.c.b16 %v677, %v676
    %v690 = vpack.c.b16 %v679, %v678
    %v691 = vpack.c.b16 %v681, %v680
    %v692 = vpack.c.b16 %v683, %v682
    %v693 = vpack.c.b16 %v685, %v684
    %702 = vmatprep.subr.bf16.mxu0 0
    %703 = vmatpush1.bf16.msra.mxu0 %v686
    %704 = vmatprep.subr.bf16.mxu0 0
    %705 = vmatpush1.bf16.msra.mxu0 %v687
    %706 = vmatprep.subr.bf16.mxu0 0
    %707 = vmatpush1.bf16.msra.mxu0 %v688
    %708 = vmatprep.subr.bf16.mxu0 0
    %709 = vmatpush1.bf16.msra.mxu0 %v689
    %710 = vmatprep.subr.bf16.mxu0 0
    %711 = vmatpush1.bf16.msra.mxu0 %v690
    %712 = vmatprep.subr.bf16.mxu0 0
    %713 = vmatpush1.bf16.msra.mxu0 %v691
    %714 = vmatprep.subr.bf16.mxu0 0
    %715 = vmatpush1.bf16.msra.mxu0 %v692
    %716 = vmatprep.subr.bf16.mxu0 0
    %717 = vmatpush1.bf16.msra.mxu0 %v693
    %718 = vmatprep.subr.bf16.mxu0 0
    %719 = vmatpush1.bf16.msra.mxu0 0
    %720 = vmatprep.subr.bf16.mxu0 0
    %721 = vmatpush1.bf16.msra.mxu0 0
    %722 = vmatprep.subr.bf16.mxu0 0
    %723 = vmatpush1.bf16.msra.mxu0 0
    %724 = vmatprep.subr.bf16.mxu0 0
    %725 = vmatpush1.bf16.msra.mxu0 0
    %726 = vmatprep.subr.bf16.mxu0 0
    %727 = vmatpush1.bf16.msra.mxu0 0
    %728 = vmatprep.subr.bf16.mxu0 0
    %729 = vmatpush1.bf16.msra.mxu0 0
    %730 = vmatprep.subr.bf16.mxu0 0
    %731 = vmatpush1.bf16.msra.mxu0 0
    %732 = vmatprep.subr.bf16.mxu0 0
    %733 = vmatpush1.bf16.msra.mxu0 0
    %734 = vmatprep.mubr.bf16.mxu0 0
    %735 = vmatmul.mubr.bf16.gmra.mrb[0].mxu0 %v635
    %v736 = vpop.f32.mrb[0].mxu0
    %v737 = vadd.f32 0.0, %v736
    %v738 = vpop.f32.mrb[0].mxu0
    %v739 = vpop.f32.mrb[0].mxu0
    %v740 = vadd.f32 0.0, %v739
    %v741 = vpop.f32.mrb[0].mxu0
    %742 = vmatprep.mubr.bf16.mxu0 0
    %743 = vmatmul.mubr.bf16.gmra.mrb[0].mxu0 %v636
    %v744 = vpop.f32.mrb[0].mxu0
    %v745 = vadd.f32 0.0, %v744
    %v746 = vpop.f32.mrb[0].mxu0
    %v747 = vpop.f32.mrb[0].mxu0
    %v748 = vadd.f32 0.0, %v747
    %v749 = vpop.f32.mrb[0].mxu0
    %750 = vdwg.mxu0
    %v751 = vadd.f32 %v621, %v737
    %v752 = vadd.f32 %v624, %v740
    %v753 = vadd.f32 %v629, %v745
    %v754 = vadd.f32 %v632, %v748
    %v755 = vld [vmem:[%s5] sm:$0x1]
    %v757 = vlaneseq
    %v758 = vshrl.u32 %v757, 7
    %v759 = vsub.s32 0, %v758
    %v760 = vrot.slane %v755, %v759
    %v762 = vadd.f32 %v751, %v760
    %v763 = vadd.f32 %v752, %v760
    %v764 = vadd.f32 %v753, %v760
    %v765 = vadd.f32 %v754, %v760
    %v766 = vmax.f32 %v762, 0.0
    %v767 = vmax.f32 %v763, 0.0
    %v768 = vmax.f32 %v764, 0.0
    %v769 = vmax.f32 %v765, 0.0
    %v770 = vadd.f32 %v766, %v767
    %v771 = vrot.slane %v770, 4
    %v772 = vadd.f32 %v770, %v771
    %v773 = vrot.slane %v772, 2
    %v774 = vadd.f32 %v772, %v773
    %v775 = vrot.slane %v774, 1
    %v776 = vadd.f32 %v774, %v775
    %v777 = vadd.f32 %v768, %v769
    %v778 = vrot.slane %v777, 4
    %v779 = vadd.f32 %v777, %v778
    %v780 = vrot.slane %v779, 2
    %v781 = vadd.f32 %v779, %v780
    %v782 = vrot.slane %v781, 1
    %v783 = vadd.f32 %v781, %v782
    %v784 = vrcp.pop 16.0
    %v785 = vmul.f32 %v776, %v784
    %v786 = vmul.f32 %v783, %v784
    %v787 = vpack.c.bf16 %v785, %v785
    %v788 = vpack.c.bf16 %v786, %v786
    %v789 = vld [vmem:[#allocation5] sm:$0xff]
    %v790 = vld [vmem:[#allocation5 + $0x8] sm:$0xff]
    %v791 = vld [vmem:[#allocation5 + $0x10] sm:$0xff]
    %v792 = vld [vmem:[#allocation5 + $0x18] sm:$0xff]
    %v793 = vld [vmem:[#allocation5 + $0x20] sm:$0xff]
    %v794 = vld [vmem:[#allocation5 + $0x28] sm:$0xff]
    %v795 = vld [vmem:[#allocation5 + $0x30] sm:$0xff]
    %v796 = vld [vmem:[#allocation5 + $0x38] sm:$0xff]
    %v797 = vld [vmem:[#allocation5 + $0x40] sm:$0xff]
    %v798 = vld [vmem:[#allocation5 + $0x48] sm:$0xff]
    %v799 = vld [vmem:[#allocation5 + $0x50] sm:$0xff]
    %v800 = vld [vmem:[#allocation5 + $0x58] sm:$0xff]
    %v801 = vld [vmem:[#allocation5 + $0x60] sm:$0xff]
    %v802 = vld [vmem:[#allocation5 + $0x68] sm:$0xff]
    %v803 = vld [vmem:[#allocation5 + $0x70] sm:$0xff]
    %v804 = vld [vmem:[#allocation5 + $0x78] sm:$0xff]
    %v805 = vld [vmem:[%s7] sm:$0x3]
    %v807 = vlaneseq
    %v808 = vshrl.u32 %v807, 7
    %v809 = vsub.s32 0, %v808
    %v810 = vrot.slane %v805, %v809
    %v811 = vlaneseq
    %v812 = vshrl.u32 %v811, 7
    %v813 = vsub.s32 1, %v812
    %v814 = vrot.slane %v805, %v813
    %v819 = vunpack.c.l.b16 %v787
    %v820 = vunpack.c.l.b16 %v788
    %vm821 = vcmask 1041409
    %v822 = vsel %vm821, %v820, %v819
    %v823 = vpack.c.b16 %v822, %v822
    %v841 = vunpack.c.l.b16 %v789
    %v842 = vunpack.c.h.b16 %v789
    %v843 = vunpack.c.l.b16 %v790
    %v844 = vunpack.c.h.b16 %v790
    %v845 = vunpack.c.l.b16 %v791
    %v846 = vunpack.c.h.b16 %v791
    %v847 = vunpack.c.l.b16 %v792
    %v848 = vunpack.c.h.b16 %v792
    %v849 = vunpack.c.l.b16 %v793
    %v850 = vunpack.c.h.b16 %v793
    %v851 = vunpack.c.l.b16 %v794
    %v852 = vunpack.c.h.b16 %v794
    %v853 = vunpack.c.l.b16 %v795
    %v854 = vunpack.c.h.b16 %v795
    %v855 = vunpack.c.l.b16 %v796
    %v856 = vunpack.c.h.b16 %v796
    %v857 = vunpack.c.l.b16 %v797
    %v858 = vunpack.c.h.b16 %v797
    %v859 = vunpack.c.l.b16 %v798
    %v860 = vunpack.c.h.b16 %v798
    %v861 = vunpack.c.l.b16 %v799
    %v862 = vunpack.c.h.b16 %v799
    %v863 = vunpack.c.l.b16 %v800
    %v864 = vunpack.c.h.b16 %v800
    %v865 = vunpack.c.l.b16 %v801
    %v866 = vunpack.c.h.b16 %v801
    %v867 = vunpack.c.l.b16 %v802
    %v868 = vunpack.c.h.b16 %v802
    %v869 = vunpack.c.l.b16 %v803
    %v870 = vunpack.c.h.b16 %v803
    %v871 = vunpack.c.l.b16 %v804
    %v872 = vunpack.c.h.b16 %v804
    %v873 = vpack.c.b16 %v843, %v841
    %v874 = vpack.c.b16 %v844, %v842
    %v875 = vpack.c.b16 %v847, %v845
    %v876 = vpack.c.b16 %v848, %v846
    %v877 = vpack.c.b16 %v851, %v849
    %v878 = vpack.c.b16 %v852, %v850
    %v879 = vpack.c.b16 %v855, %v853
    %v880 = vpack.c.b16 %v856, %v854
    %v881 = vpack.c.b16 %v859, %v857
    %v882 = vpack.c.b16 %v860, %v858
    %v883 = vpack.c.b16 %v863, %v861
    %v884 = vpack.c.b16 %v864, %v862
    %v885 = vpack.c.b16 %v867, %v865
    %v886 = vpack.c.b16 %v868, %v866
    %v887 = vpack.c.b16 %v871, %v869
    %v888 = vpack.c.b16 %v872, %v870
    %905 = vmatprep.subr.bf16.mxu0 %v874
    %906 = vmatpush1.bf16.msra.mxu0 %v873
    %907 = vmatprep.subr.bf16.mxu0 %v876
    %908 = vmatpush1.bf16.msra.mxu0 %v875
    %909 = vmatprep.subr.bf16.mxu0 %v878
    %910 = vmatpush1.bf16.msra.mxu0 %v877
    %911 = vmatprep.subr.bf16.mxu0 %v880
    %912 = vmatpush1.bf16.msra.mxu0 %v879
    %913 = vmatprep.subr.bf16.mxu0 %v882
    %914 = vmatpush1.bf16.msra.mxu0 %v881
    %915 = vmatprep.subr.bf16.mxu0 %v884
    %916 = vmatpush1.bf16.msra.mxu0 %v883
    %917 = vmatprep.subr.bf16.mxu0 %v886
    %918 = vmatpush1.bf16.msra.mxu0 %v885
    %919 = vmatprep.subr.bf16.mxu0 %v888
    %920 = vmatpush1.bf16.msra.mxu0 %v887
    %921 = vmatprep.subr.bf16.mxu0 0
    %922 = vmatpush1.bf16.msra.mxu0 0
    %923 = vmatprep.subr.bf16.mxu0 0
    %924 = vmatpush1.bf16.msra.mxu0 0
    %925 = vmatprep.subr.bf16.mxu0 0
    %926 = vmatpush1.bf16.msra.mxu0 0
    %927 = vmatprep.subr.bf16.mxu0 0
    %928 = vmatpush1.bf16.msra.mxu0 0
    %929 = vmatprep.subr.bf16.mxu0 0
    %930 = vmatpush1.bf16.msra.mxu0 0
    %931 = vmatprep.subr.bf16.mxu0 0
    %932 = vmatpush1.bf16.msra.mxu0 0
    %933 = vmatprep.subr.bf16.mxu0 0
    %934 = vmatpush1.bf16.msra.mxu0 0
    %935 = vmatprep.subr.bf16.mxu0 0
    %936 = vmatpush1.bf16.msra.mxu0 0
    %937 = vmatprep.mubr.bf16.mxu0 0
    %938 = vmatmul.mubr.bf16.gmra.mrb[0].mxu0 %v823
    %v939 = vpop.f32.mrb[0].mxu0
    %v940 = vadd.f32 %v810, %v939
    %v941 = vpop.f32.mrb[0].mxu0
    %v942 = vadd.f32 %v814, %v941
    %v943 = vpop.f32.mrb[0].mxu0
    %v944 = vpop.f32.mrb[0].mxu0
    %945 = vdwg.mxu0
    %v946 = vld [vmem:[%s1] sm:$0x3]
    %v947 = vmul.f32 %v942, 0.5
    %v948 = vmul.f32 %v947, 1.442695
    %v949 = vpow.pop %v948
    %v950 = vmul.f32 %v946, %v949
    %v951 = vadd.f32 %v940, %v950
    %v954 = vcombine.low %v940, %v942
    %v956 = vunpack.c.l.s4 1983009808
    %v957 = vunpack.c.0.s8 %v956
    %v958 = vlaneseq
    %v959 = vshrl.u32 %v958, 7
    %v960 = vsub.s32 %v957, %v959
    %v961 = vrot.slane %v954, %v960
    %963 = vst [vmem:[#allocation7] sm:$0xf] %v961
    %964 = vst [vmem:[#allocation7 + $0x4] sm:$0x3] %v951
    // Predicated region
    $region42: #{tpu_custom_call.1} parent=1 // pred_check
      _
    $region43: #{tpu_custom_call.1} parent=1 // pred_check_branch
      %966 = sbr.rel (0) target = $region45
    $region44: #{tpu_custom_call.1} parent=1 // pred_region
      %s968 = ssub.s32 96, 96
      %969 = vsyncadd [#allocation4], %s968
      %s971 = sshll.u32 [#allocation7], 4
      %s972 = int_to_ptr.vmem [resolvable:$true] %s971
      %974 = dma.vmem_to_hbm [thread:$0]  %s972, 96, %s8, [#allocation4]
    $region45: #{tpu_custom_call.1} parent=1 // pred_fallthru
      _
    // Predicated region
    $region46: #{tpu_custom_call.1} parent=1 // pred_check
      _
    $region47: #{tpu_custom_call.1} parent=1 // pred_check_branch
      %976 = sbr.rel (0) target = $region49
    $region48: #{tpu_custom_call.1} parent=1 // pred_region
      %977 = dma.done [#allocation4], 96
    $region49: #{tpu_custom_call.1} parent=1 // pred_fallthru
      _
    %978 = vsyncpa [#allocation3], 1
    %979 = vsyncpa [#allocation6], 1
    %980 = vsyncpa [#allocation4], 1

</llo_original>
